<compile_context>
chip_gen: v6e
topology: v6e:2x2x1
jax: 0.10.0
libtpu: 0.0.40
codegen_flags: <defaults>
</compile_context>

<pallas_src>
import jax
import jax.numpy as jnp
from jax.experimental import pallas as pl
from jax.experimental.pallas import tpu as pltpu


def _ttr_kernel(x_ref, ws_ref, off_ref, o_ref):
    # Regressor matmul on the MXU with f32 accumulation; the StandardScaler
    # inverse_transform is pre-folded into ws/off, so the epilogue is a single
    # broadcast add (VALU) and the cast on store.
    y = jnp.dot(x_ref[...], ws_ref[...], preferred_element_type=jnp.float32)
    o_ref[...] = (y + off_ref[...]).astype(o_ref.dtype)


def _round_up(x, m):
    return (x + m - 1) // m * m


def _pick_row_tile(n, d, itemsize):
    # Target ~4 MiB per x tile so the double-buffered pipeline stays well inside
    # the scoped-VMEM default on every chip (v5e 16 MiB .. v7x 32 MiB), while the
    # tile is big enough to approach the HBM roofline for typical (small) D.
    target_bytes = 4 << 20
    cap = max(8, (target_bytes // max(1, d * itemsize)) // 8 * 8)
    cap = min(cap, 2048)
    if n <= cap:
        if n > 16:
            # Prefer >= 2 grid steps: gives the pipeline work to overlap and lets
            # the "parallel" row axis shard across both TensorCores on v7x.
            return _round_up(n, 16) // 2          # multiple of 8 by construction
        return _round_up(max(n, 8), 8)
    return cap


def transformed_target_regressor_forward(
    x, weight, bias, scaler_mean, scaler_scale, *, training_dim=1, row_tile=None
):
    """Fused predict() of TorchTransformedTargetRegressor.

    regressor:   linear regression,  y = x @ weight.T + bias   (weight: (O, D))
    transformer: StandardScaler,     inverse_transform(y) = y * scale + mean

    Folded form used by the kernel:  y = x @ (weight.T * scale) + (bias*scale + mean)
    """
    N, D = x.shape
    O = weight.shape[0]

    if row_tile is None:
        row_tile = _pick_row_tile(N, D, x.dtype.itemsize)

    # Fold the tiny parameter math once in the wrapper, in f32 (matches torch's
    # f32 parameter math).  Only the final store casts to x.dtype.
    w32 = jnp.asarray(weight, jnp.float32)                 # (O, D)
    s32 = jnp.asarray(scaler_scale, jnp.float32)           # (O,)
    ws = w32.T * s32[None, :]                              # (D, O): scale folded into W^T
    off = (jnp.asarray(bias, jnp.float32) * s32
           + jnp.asarray(scaler_mean, jnp.float32)).reshape(1, O)

    grid = (pl.cdiv(N, row_tile),)                         # ragged edge block is masked
    y = pl.pallas_call(
        _ttr_kernel,
        out_shape=jax.ShapeDtypeStruct((N, O), x.dtype),
        grid_spec=pltpu.PrefetchScalarGridSpec(
            num_scalar_prefetch=0,
            grid=grid,
            in_specs=[
                pl.BlockSpec((row_tile, D), lambda i: (i, 0)),  # x: streamed row tiles
                pl.BlockSpec((D, O), lambda i: (0, 0)),          # W^T * scale: VMEM resident
                pl.BlockSpec((1, O), lambda i: (0, 0)),          # bias*scale + mean: resident
            ],
            out_specs=pl.BlockSpec((row_tile, O), lambda i: (i, 0)),
        ),
        compiler_params=pltpu.CompilerParams(
            dimension_semantics=("parallel",),   # rows independent -> megacore shard
            vmem_limit_bytes=32 * 1024 * 1024,    # explicit, safe on v5e/v6e/v7x
        ),
    )(x, ws, off)

    # predict(): training_dim == 1 squeezes the singleton target column.
    if training_dim == 1 and y.ndim == 2 and y.shape[1] == 1:
        y = y[:, 0]
    return y


if __name__ == "__main__":
    key = jax.random.PRNGKey(0)
    kx, kw, kb, km, ks = jax.random.split(key, 5)

    # Small shapes consistent with the module: 64 samples, 32 features, 1 target.
    N, D, O = 64, 32, 1
    x = jax.random.normal(kx, (N, D), dtype=jnp.float32)
    # "Fitted" parameters of the wrapped regressor / transformer.
    weight = jax.random.normal(kw, (O, D), dtype=jnp.float32) * 0.1   # regressor coef
    bias = jax.random.normal(kb, (O,), dtype=jnp.float32)              # regressor intercept
    mean = jax.random.normal(km, (O,), dtype=jnp.float32)              # scaler mean_
    scale = jax.random.uniform(ks, (O,), dtype=jnp.float32, minval=0.5, maxval=2.0)  # scaler scale_

    out = transformed_target_regressor_forward(
        x, weight, bias, mean, scale, training_dim=1
    )
    out = jax.block_until_ready(out)

    # Pure-JAX reference of the module's predict() (un-folded form).
    y_ref = jnp.dot(x, weight.T, precision=jax.lax.Precision.HIGHEST) + bias[None, :]
    y_ref = y_ref * scale[None, :] + mean[None, :]
    y_ref = y_ref[:, 0]  # training_dim == 1 squeeze

    assert out.shape == y_ref.shape, (out.shape, y_ref.shape)
    assert jnp.allclose(out, y_ref, atol=1e-3, rtol=1e-3), "mismatch vs reference"
    print("KERNEL_OK")
</pallas_src>

<mosaic_0001>
module attributes {stable_mosaic.version = 11 : i64} {
  func.func @_ttr_kernel(%arg0: i32, %arg1: memref<32x32xf32, #tpu.memory_space<vmem>>, %arg2: memref<32x1xf32, #tpu.memory_space<vmem>>, %arg3: memref<1x1xf32, #tpu.memory_space<vmem>>, %arg4: memref<32x1xf32, #tpu.memory_space<vmem>>) attributes {dimension_semantics = [#tpu.dimension_semantics<parallel>], iteration_bounds = array<i64: 2>, scalar_prefetch = 0 : i64, scratch_operands = 0 : i64, tpu.core_type = #tpu.core_type<tc>, window_params = [{transform_indices = @transform_0, window_bounds = array<i64: 32, 32>}, {pipeline_mode = #tpu.pipeline_mode<synchronous>, transform_indices = @transform_1, window_bounds = array<i64: 32, 1>}, {pipeline_mode = #tpu.pipeline_mode<synchronous>, transform_indices = @transform_2, window_bounds = array<i64: 1, 1>}, {transform_indices = @transform_3, window_bounds = array<i64: 32, 1>}]} {
    %c0 = arith.constant 0 : index
    %c0_0 = arith.constant 0 : index
    %0 = vector.load %arg1[%c0, %c0_0] : memref<32x32xf32, #tpu.memory_space<vmem>>, vector<32x32xf32>
    %c0_1 = arith.constant 0 : index
    %c0_2 = arith.constant 0 : index
    %1 = vector.load %arg2[%c0_1, %c0_2] : memref<32x1xf32, #tpu.memory_space<vmem>>, vector<32x1xf32>
    %cst = arith.constant dense<0.000000e+00> : vector<32x1xf32>
    %2 = tpu.matmul %0, %1, %cst {dimension_numbers = #tpu.dot_dimension_numbers<[1], [0], [0], [1], [0, 0, 1, 1], [], []>} : vector<32x32xf32>, vector<32x1xf32>, vector<32x1xf32> -> vector<32x1xf32>
    %c0_3 = arith.constant 0 : index
    %c0_4 = arith.constant 0 : index
    %3 = vector.load %arg3[%c0_3, %c0_4] : memref<1x1xf32, #tpu.memory_space<vmem>>, vector<1x1xf32>
    %4 = vector.broadcast %3 : vector<1x1xf32> to vector<32x1xf32>
    %5 = arith.addf %2, %4 : vector<32x1xf32>
    %c0_5 = arith.constant 0 : index
    %c0_6 = arith.constant 0 : index
    %6 = vector.load %arg4[%c0_5, %c0_6] : memref<32x1xf32, #tpu.memory_space<vmem>>, vector<32x1xf32>
    tpu.vector_store %arg4[%c0_5, %c0_6], %5 {strides = array<i32>} : memref<32x1xf32, #tpu.memory_space<vmem>>, vector<32x1xf32>,
    return
  }
  func.func @transform_0(%arg0: i32) -> (i32, i32) {
    %c0_i32 = arith.constant 0 : i32
    %c0_i32_0 = arith.constant 0 : i32
    return %arg0, %c0_i32 : i32, i32
  }
  func.func @transform_1(%arg0: i32) -> (i32, i32) {
    %c0_i32 = arith.constant 0 : i32
    %c0_i32_0 = arith.constant 0 : i32
    %c0_i32_1 = arith.constant 0 : i32
    return %c0_i32, %c0_i32_0 : i32, i32
  }
  func.func @transform_2(%arg0: i32) -> (i32, i32) {
    %c0_i32 = arith.constant 0 : i32
    %c0_i32_0 = arith.constant 0 : i32
    %c0_i32_1 = arith.constant 0 : i32
    return %c0_i32, %c0_i32_0 : i32, i32
  }
  func.func @transform_3(%arg0: i32) -> (i32, i32) {
    %c0_i32 = arith.constant 0 : i32
    %c0_i32_0 = arith.constant 0 : i32
    return %arg0, %c0_i32 : i32, i32
  }
}

</mosaic_0001>

<llo_original>
// kernel: tpu_custom_call.1
$region0: #{tpu_custom_call.1}
  #allocation0 [shape = 'u32[]', space=smem, size = 0x4, offset = 0x4, fixed_abs, tag = 'smem constant byte address 0x4 - core index']
  #allocation1 [shape = 'u32[144,128]{1,0:T(1,128)}', space=vmem, size = 0x12000, scoped, tag = 'internal scratch']
  #allocation2 [shape = 'f32[1,1]{1,0:T(1,128)S(1)}', space=vmem, size = 0x200, scoped, tag = 'scoped memory for tpu_custom_call.1']
  %s0 = inlined_call_operand.vmem [shape: f32[64,32], index: 0, kind: input, shape index: {}]
  %s1 = inlined_call_operand.vmem [shape: f32[32,1], index: 1, kind: input, shape index: {}]
  %s2 = inlined_call_operand.<no memory space> [shape: f32[1,1], index: 2, kind: input, shape index: {}]
  %s3 = inlined_call_operand.vmem [shape: f32[64,1], index: 3, kind: output, shape index: {}]
  %s4 = sld [smem:[#allocation0]]
  $region45: #{tpu_custom_call.1} parent=0
    _
  %s6 = ssub.s32 1, %s4
  %s7 = scalar_select 0, %s6, %s4
  %v8 = vstv %s2
  %9 = vst [vmem:[#allocation2] sm:$0x1] %v8
  loop: start=0, step=1, limit=4
  $region2: #{tpu_custom_call.1} parent=0 // loop_pre_header
    _
  $region3: #{tpu_custom_call.1} parent=0 // loop_header
    %s11 = sphi 0, %s15
    %p12 = scmp.ge.s32.totalorder %s11, 4
    %s21 = sphi 0, %s23
    %s24 = sphi 0, %s21
    %s25 = sphi 0, %s24
    %s41 = sphi 0, %s25
    %s45 = sphi 0, %s45
    %s47 = sphi 0, %s45
    %s48 = sphi 0, %s47
    %s62 = sphi 0, %s48
    %s66 = sphi 0, %s66
    %s68 = sphi 0, %s66
    %s69 = sphi 0, %s68
    %s83 = sphi 0, %s69
    %s89 = sphi 0, %s91
    %s92 = sphi 0, %s89
    %s93 = sphi 0, %s92
    %s109 = sphi 0, %s93
  $region4: #{tpu_custom_call.1} parent=0 // loop_header_branch
    %14 = sbr.rel (%p12) target = $region8
  $region5: #{tpu_custom_call.1} parent=0 // loop_body
    %s16 = ssub.s32 %s11, 1
    %s17 = ssub.s32 %s11, 2
    %s18 = sadd.s32 %s11, 1
    %s19 = ssub.s32 %s11, %s18
    %p20 = scmp.eq.s32.totalorder %s19, 0
    %s22 = sadd.s32 %s21, 1
    %s23 = scalar_select %p20, %s21, %s22
    %p26 = pneg %p20
    %p27 = scmp.eq.s32.totalorder %s11, 1
    %p28 = por %p26, %p27
    %p29 = scmp.ne.s32.totalorder %s21, %s24
    %p30 = scmp.eq.s32.totalorder %s11, 0
    %p31 = por %p29, %p30
    %p32 = scmp.ne.s32.totalorder %s21, %s24
    %p33 = scmp.eq.s32.totalorder %s16, 1
    %p34 = por %p32, %p33
    %p35 = scmp.ne.s32.totalorder %s24, %s25
    %p36 = scmp.eq.s32.totalorder %s16, 0
    %p37 = por %p35, %p36
    %p38 = scmp.ne.s32.totalorder %s24, %s25
    %p39 = scmp.eq.s32.totalorder %s17, 1
    %p40 = por %p38, %p39
    %p42 = scmp.ne.s32.totalorder %s25, %s41
    %p43 = scmp.eq.s32.totalorder %s17, 0
    %p44 = por %p42, %p43
    %s46 = sadd.s32 %s45, 1
    %p49 = scmp.eq.s32.totalorder %s11, 1
    %p50 = scmp.ne.s32.totalorder %s45, %s47
    %p51 = scmp.eq.s32.totalorder %s11, 0
    %p52 = por %p50, %p51
    %p53 = scmp.ne.s32.totalorder %s45, %s47
    %p54 = scmp.eq.s32.totalorder %s16, 1
    %p55 = por %p53, %p54
    %p56 = scmp.ne.s32.totalorder %s47, %s48
    %p57 = scmp.eq.s32.totalorder %s16, 0
    %p58 = por %p56, %p57
    %p59 = scmp.ne.s32.totalorder %s47, %s48
    %p60 = scmp.eq.s32.totalorder %s17, 1
    %p61 = por %p59, %p60
    %p63 = scmp.ne.s32.totalorder %s48, %s62
    %p64 = scmp.eq.s32.totalorder %s17, 0
    %p65 = por %p63, %p64
    %s67 = sadd.s32 %s66, 1
    %p70 = scmp.eq.s32.totalorder %s11, 1
    %p71 = scmp.ne.s32.totalorder %s66, %s68
    %p72 = scmp.eq.s32.totalorder %s11, 0
    %p73 = por %p71, %p72
    %p74 = scmp.ne.s32.totalorder %s66, %s68
    %p75 = scmp.eq.s32.totalorder %s16, 1
    %p76 = por %p74, %p75
    %p77 = scmp.ne.s32.totalorder %s68, %s69
    %p78 = scmp.eq.s32.totalorder %s16, 0
    %p79 = por %p77, %p78
    %p80 = scmp.ne.s32.totalorder %s68, %s69
    %p81 = scmp.eq.s32.totalorder %s17, 1
    %p82 = por %p80, %p81
    %p84 = scmp.ne.s32.totalorder %s69, %s83
    %p85 = scmp.eq.s32.totalorder %s17, 0
    %p86 = por %p84, %p85
    %s87 = ssub.s32 %s11, %s18
    %p88 = scmp.eq.s32.totalorder %s87, 0
    %s90 = sadd.s32 %s89, 1
    %s91 = scalar_select %p88, %s89, %s90
    %p94 = pneg %p88
    %p95 = scmp.eq.s32.totalorder %s11, 1
    %p96 = por %p94, %p95
    %p97 = scmp.ne.s32.totalorder %s89, %s92
    %p98 = scmp.eq.s32.totalorder %s11, 0
    %p99 = por %p97, %p98
    %p100 = scmp.ne.s32.totalorder %s89, %s92
    %p101 = scmp.eq.s32.totalorder %s16, 1
    %p102 = por %p100, %p101
    %p103 = scmp.ne.s32.totalorder %s92, %s93
    %p104 = scmp.eq.s32.totalorder %s16, 0
    %p105 = por %p103, %p104
    %p106 = scmp.ne.s32.totalorder %s92, %s93
    %p107 = scmp.eq.s32.totalorder %s17, 1
    %p108 = por %p106, %p107
    %p110 = scmp.ne.s32.totalorder %s93, %s109
    %p111 = scmp.eq.s32.totalorder %s17, 0
    %p112 = por %p110, %p111
    %p113 = scmp.le.s32.totalorder 1, %s11
    %p114 = scmp.lt.s32.totalorder %s11, 3
    %p115 = pnand %p113, %p114
    %p116 = pneg %p115
    // Predicated region
    $region9: #{tpu_custom_call.1} parent=5 // pred_check
      _
    $region10: #{tpu_custom_call.1} parent=5 // pred_check_branch
      %118 = sbr.rel (%p115) target = $region12
    $region11: #{tpu_custom_call.1} parent=5 // pred_region
      %s119 = ssub.s32 %s11, 1
      // Predicated region
      $region13: #{tpu_custom_call.1} parent=11 // pred_check
        %p120 = pneg %p58
      $region14: #{tpu_custom_call.1} parent=11 // pred_check_branch
        %122 = sbr.rel (%p120) target = $region16
      $region15: #{tpu_custom_call.1} parent=11 // pred_region
        _
      $region16: #{tpu_custom_call.1} parent=11 // pred_fallthru
        _
      // Predicated region
      $region17: #{tpu_custom_call.1} parent=11 // pred_check
        %p123 = pneg %p79
      $region18: #{tpu_custom_call.1} parent=11 // pred_check_branch
        %125 = sbr.rel (%p123) target = $region20
      $region19: #{tpu_custom_call.1} parent=11 // pred_region
        _
      $region20: #{tpu_custom_call.1} parent=11 // pred_fallthru
        _
    $region12: #{tpu_custom_call.1} parent=5 // pred_fallthru
      _
    %p126 = scmp.lt.s32.totalorder %s11, 2
    // Predicated region
    $region21: #{tpu_custom_call.1} parent=5 // pred_check
      %p127 = pneg %p126
    $region22: #{tpu_custom_call.1} parent=5 // pred_check_branch
      %129 = sbr.rel (%p127) target = $region24
    $region23: #{tpu_custom_call.1} parent=5 // pred_region
      // Predicated region
      $region25: #{tpu_custom_call.1} parent=23 // pred_check
        %p130 = pneg %p31
      $region26: #{tpu_custom_call.1} parent=23 // pred_check_branch
        %132 = sbr.rel (%p130) target = $region28
      $region27: #{tpu_custom_call.1} parent=23 // pred_region
        %s133 = smul.u32 4, %s11
        %p134 = scmp.lt.s32.totalorder %s133, 7
        %s135 = scalar_select %p134, %s133, 7
        %s136 = smul.addr %s135, 8
        %s137 = scalar_lea.vmem %s0, %s136
        %s138 = smul.u32 4, %s11
      $region28: #{tpu_custom_call.1} parent=23 // pred_fallthru
        _
    $region24: #{tpu_custom_call.1} parent=5 // pred_fallthru
      _
    %p139 = scmp.le.s32.totalorder 1, %s11
    %p140 = scmp.lt.s32.totalorder %s11, 3
    %p141 = pnand %p139, %p140
    %p142 = pneg %p141
    // Predicated region
    $region29: #{tpu_custom_call.1} parent=5 // pred_check
      _
    $region30: #{tpu_custom_call.1} parent=5 // pred_check_branch
      %144 = sbr.rel (%p141) target = $region32
    $region31: #{tpu_custom_call.1} parent=5 // pred_region
      %s145 = ssub.s32 %s11, 1
      %s146 = smul.u32 4, %s16
      %p147 = scmp.lt.s32.totalorder %s146, 7
      %s148 = scalar_select %p147, %s146, 7
      %s149 = smul.addr %s148, 8
      %s150 = scalar_lea.vmem %s0, %s149
      %p151 = pneg %p37
      %p152 = pneg %p34
      %p153 = pneg %p58
      %p154 = pneg %p55
      %p155 = pneg %p79
      %p156 = pneg %p76
      %p157 = pneg %p105
      %p158 = pneg %p102
      %s159 = smul.u32 4, %s16
      %p160 = scmp.lt.s32.totalorder %s159, 7
      %s161 = scalar_select %p160, %s159, 7
      %s162 = smul.addr %s161, 8
      %s163 = scalar_lea.vmem %s3, %s162
      %s164 = smul.u32 4, %s16
      %p165 = scmp.lt.s32.totalorder %s164, 7
      %s166 = scalar_select %p165, %s164, 7
      %s167 = smul.addr %s166, 8
      %s168 = scalar_lea.vmem %s0, %s167
      %s169 = smul.u32 4, %s16
      %s170 = smul.u32 4, %s16
      %p171 = scmp.lt.s32.totalorder %s170, 7
      %s172 = scalar_select %p171, %s170, 7
      %s173 = smul.addr %s172, 8
      %s174 = scalar_lea.vmem %s3, %s173
      %s175 = smul.u32 4, %s16
      %v176 = vld [vmem:[%s168] sm:$0xff]
      %v177 = vld [vmem:[%s168 + $0x8] sm:$0xff]
      %v178 = vld [vmem:[%s168 + $0x10] sm:$0xff]
      %v179 = vld [vmem:[%s168 + $0x18] sm:$0xff]
      %v180 = vld [vmem:[%s1] sm:$0xff]
      %v181 = vld [vmem:[%s1 + $0x8] sm:$0xff]
      %v182 = vld [vmem:[%s1 + $0x10] sm:$0xff]
      %v183 = vld [vmem:[%s1 + $0x18] sm:$0xff]
      %v184 = vld [vmem:[#allocation2] sm:$0x1]
      %v186 = vlaneseq
      %v187 = vshrl.u32 %v186, 7
      %v188 = vsub.s32 0, %v187
      %v189 = vrot.slane %v184, %v188
      %vm191 = vcmask 261120
      %v193 = vsel %vm191, %v176, 0
      %v196 = vsel %vm191, %v177, 0
      %v199 = vsel %vm191, %v178, 0
      %v202 = vsel %vm191, %v179, 0
      %204 = vmatprep.subr.mxu0 0.0
      %205 = vmatpush1.msra.mxu0 0.0
      %206 = vmatprep.subr.mxu0 0.0
      %207 = vmatpush1.msra.mxu0 0.0
      %208 = vmatprep.subr.mxu0 0.0
      %209 = vmatpush1.msra.mxu0 0.0
      %210 = vmatprep.subr.mxu0 0.0
      %211 = vmatpush1.msra.mxu0 0.0
      %212 = vmatprep.subr.mxu0 0.0
      %213 = vmatpush1.msra.mxu0 0.0
      %214 = vmatprep.subr.mxu0 0.0
      %215 = vmatpush1.msra.mxu0 0.0
      %216 = vmatprep.subr.mxu0 0.0
      %217 = vmatpush1.msra.mxu0 0.0
      %218 = vmatprep.subr.mxu0 0.0
      %219 = vmatpush1.msra.mxu0 0.0
      %220 = vmatprep.subr.mxu0 0.0
      %221 = vmatpush1.msra.mxu0 0.0
      %222 = vmatprep.subr.mxu0 0.0
      %223 = vmatpush1.msra.mxu0 0.0
      %224 = vmatprep.subr.mxu0 0.0
      %225 = vmatpush1.msra.mxu0 0.0
      %226 = vmatprep.subr.mxu0 0.0
      %227 = vmatpush1.msra.mxu0 0.0
      %228 = vmatprep.subr.mxu0 0.0
      %229 = vmatpush1.msra.mxu0 %v183
      %230 = vmatprep.subr.mxu0 0.0
      %231 = vmatpush1.msra.mxu0 %v182
      %232 = vmatprep.subr.mxu0 0.0
      %233 = vmatpush1.msra.mxu0 %v181
      %234 = vmatprep.subr.mxu0 0.0
      %235 = vmatpush1.msra.mxu0 %v180
      %236 = vmatprep.subr.mxu0 0.0
      %237 = vmatpush2.msra.mxu0 0.0
      %238 = vmatprep.subr.mxu0 0.0
      %239 = vmatpush2.msra.mxu0 0.0
      %240 = vmatprep.subr.mxu0 0.0
      %241 = vmatpush2.msra.mxu0 0.0
      %242 = vmatprep.subr.mxu0 0.0
      %243 = vmatpush2.msra.mxu0 0.0
      %244 = vmatprep.subr.mxu0 0.0
      %245 = vmatpush2.msra.mxu0 0.0
      %246 = vmatprep.subr.mxu0 0.0
      %247 = vmatpush2.msra.mxu0 0.0
      %248 = vmatprep.subr.mxu0 0.0
      %249 = vmatpush2.msra.mxu0 0.0
      %250 = vmatprep.subr.mxu0 0.0
      %251 = vmatpush2.msra.mxu0 0.0
      %252 = vmatprep.subr.mxu0 0.0
      %253 = vmatpush2.msra.mxu0 0.0
      %254 = vmatprep.subr.mxu0 0.0
      %255 = vmatpush2.msra.mxu0 0.0
      %256 = vmatprep.subr.mxu0 0.0
      %257 = vmatpush2.msra.mxu0 0.0
      %258 = vmatprep.subr.mxu0 0.0
      %259 = vmatpush2.msra.mxu0 0.0
      %260 = vmatprep.subr.mxu0 0.0
      %261 = vmatpush2.msra.mxu0 0.0
      %262 = vmatprep.subr.mxu0 0.0
      %263 = vmatpush2.msra.mxu0 0.0
      %264 = vmatprep.subr.mxu0 0.0
      %265 = vmatpush2.msra.mxu0 0.0
      %266 = vmatprep.subr.mxu0 0.0
      %267 = vmatpush2.msra.mxu0 0.0
      %268 = vmatprep.mubr.f32.mxu0 0.0
      %269 = vmatmul.mubr.f32.gmra.mxu0 %v193
      %v270 = vpop.f32.mrf.mxu0
      %v271 = vadd.f32 %v189, %v270
      %v272 = vpop.f32.mrf.mxu0
      %273 = vmatprep.mubr.f32.mxu0 0.0
      %274 = vmatmul.mubr.f32.gmra.mxu0 %v196
      %v275 = vpop.f32.mrf.mxu0
      %v276 = vadd.f32 %v189, %v275
      %v277 = vpop.f32.mrf.mxu0
      %278 = vmatprep.mubr.f32.mxu0 0.0
      %279 = vmatmul.mubr.f32.gmra.mxu0 %v199
      %v280 = vpop.f32.mrf.mxu0
      %v281 = vadd.f32 %v189, %v280
      %v282 = vpop.f32.mrf.mxu0
      %283 = vmatprep.mubr.f32.mxu0 0.0
      %284 = vmatmul.mubr.f32.gmra.mxu0 %v202
      %v285 = vpop.f32.mrf.mxu0
      %v286 = vadd.f32 %v189, %v285
      %v287 = vpop.f32.mrf.mxu0
      %288 = vdwg.mxu0
      %vm289 = vcmask 7168
      %290 = vst.msk [vmem:[%s174] sm:$0xff] %vm289, %v271
      %291 = vst.msk [vmem:[%s174 + $0x8] sm:$0xff] %vm289, %v276
      %292 = vst.msk [vmem:[%s174 + $0x10] sm:$0xff] %vm289, %v281
      %293 = vst.msk [vmem:[%s174 + $0x18] sm:$0xff] %vm289, %v286
      %s294 = smul.u32 4, %s16
      %p295 = scmp.lt.s32.totalorder %s294, 7
      %s296 = scalar_select %p295, %s294, 7
      %s297 = smul.addr %s296, 8
      %s298 = scalar_lea.vmem %s3, %s297
      // Predicated region
      $region33: #{tpu_custom_call.1} parent=31 // pred_check
        %p299 = pneg %p102
      $region34: #{tpu_custom_call.1} parent=31 // pred_check_branch
        %301 = sbr.rel (%p299) target = $region36
      $region35: #{tpu_custom_call.1} parent=31 // pred_region
        %s302 = smul.u32 4, %s16
      $region36: #{tpu_custom_call.1} parent=31 // pred_fallthru
        _
    $region32: #{tpu_custom_call.1} parent=5 // pred_fallthru
      _
    %p303 = scmp.le.s32.totalorder 2, %s11
    // Predicated region
    $region37: #{tpu_custom_call.1} parent=5 // pred_check
      %p304 = pneg %p303
    $region38: #{tpu_custom_call.1} parent=5 // pred_check_branch
      %306 = sbr.rel (%p304) target = $region40
    $region39: #{tpu_custom_call.1} parent=5 // pred_region
      %s307 = ssub.s32 %s11, 2
      // Predicated region
      $region41: #{tpu_custom_call.1} parent=39 // pred_check
        %p308 = pneg %p108
      $region42: #{tpu_custom_call.1} parent=39 // pred_check_branch
        %310 = sbr.rel (%p308) target = $region44
      $region43: #{tpu_custom_call.1} parent=39 // pred_region
        %s311 = smul.u32 4, %s17
        %p312 = scmp.lt.s32.totalorder %s311, 7
        %s313 = scalar_select %p312, %s311, 7
        %s314 = smul.addr %s313, 8
        %s315 = scalar_lea.vmem %s3, %s314
      $region44: #{tpu_custom_call.1} parent=39 // pred_fallthru
        _
    $region40: #{tpu_custom_call.1} parent=5 // pred_fallthru
      _
  $region6: #{tpu_custom_call.1} parent=0 // loop_footer
    %s15 = sadd.s32 1, %s11
  $region7: #{tpu_custom_call.1} parent=0 // loop_footer_branch
    %10 = sbr.rel target = $region3
  $region8: #{tpu_custom_call.1} parent=0 // loop_exit
    _

</llo_original>
